<compile_context>
chip_gen: v7x
topology: tpu7x:2x2x1
jax: 0.10.0
libtpu: 0.0.40
codegen_flags: <defaults>
</compile_context>

<pallas_src>
import functools
import math

import jax
import jax.numpy as jnp
import numpy as np
from jax.experimental import pallas as pl
from jax.experimental.pallas import tpu as pltpu

_LANES = 128
_TOKEN_ALIGN = 1024                  # 8 sublanes * 128 lanes: keeps all blocks (8,128)-tiled
_VMEM_STEP_BUDGET = 6 * 1024 * 1024  # per-step OUTPUT bytes (total VMEM ~4x this, double-buffered)
_VMEM_LIMIT_BYTES = 48 * 1024 * 1024  # < 64 MiB (v7x physical), << 128 MiB (v5e/v6e)


def _copy_kernel(w_const_ref, i_const_ref, p_const_ref, w_ref, i_ref, p_ref):
    """Pure full-block stores from the resident pattern tile: vld + vst only."""
    w_ref[...] = w_const_ref[...]
    i_ref[...] = i_const_ref[...]
    p_ref[...] = p_const_ref[...]


@functools.lru_cache(maxsize=None)
def _pattern_tiles(seq_len, n_enemies, n_allies, topk, n_experts, tokens_per_step):
    """One per-step pattern tile, laid out as lane-dense (rows, 128) slabs.

    Cached so repeated eager calls do not re-upload the constant to the device.
    """
    pos = np.arange(tokens_per_step, dtype=np.int64) % seq_len
    # pos 0 -> expert 0 (self), 1..n_enemies -> 1 (enemies),
    # next n_allies -> 2 (allies), last token (pos == seq_len-1) -> 0.
    expert = np.where(
        pos == 0, 0,
        np.where(pos <= n_enemies, 1,
                 np.where(pos <= n_enemies + n_allies, 2, 0))).astype(np.int32)

    w = np.zeros((tokens_per_step, topk), np.float32)
    w[:, 0] = 1.0                                   # weights[:, 0] = 1 everywhere
    idx = np.zeros((tokens_per_step, topk), np.int32)
    idx[:, 0] = expert
    p = np.zeros((tokens_per_step, n_experts), np.float32)
    p[np.arange(tokens_per_step), expert] = 1.0     # one-hot(expert)

    rows_w = (tokens_per_step * topk) // _LANES
    rows_p = (tokens_per_step * n_experts) // _LANES
    return (jnp.asarray(w.reshape(rows_w, _LANES)),
            jnp.asarray(idx.reshape(rows_w, _LANES)),
            jnp.asarray(p.reshape(rows_p, _LANES)))


def gate_v3_forward(x, *, n_agents, n_enemies, topk, n_routed_experts):
    """JAX/Pallas equivalent of Gate_v3.forward.

    Args:
      x: (batch*n_agents*seq_len, dim) array (values unused; shape witness).
    Returns:
      (weights, indices, stats) mirroring the PyTorch module
      (indices are int32 instead of torch int64; stats stay on device).
    """
    seq_len = 1 + n_enemies + (n_agents - 1) + 1
    n_allies = n_agents - 1
    n_experts = n_routed_experts
    n_tokens = x.shape[0]

    # ---- step-size selection ------------------------------------------------
    # tokens_per_step must be a multiple of lcm(seq_len, 1024):
    #   * multiple of 1024 -> every slab block is (multiple-of-8, 128)
    #   * multiple of seq_len -> every grid step starts at window position 0,
    #     so all steps write the SAME tile (enables the copy-based kernel).
    period = (seq_len * _TOKEN_ALIGN) // math.gcd(seq_len, _TOKEN_ALIGN)
    bytes_per_token = 4 * (2 * topk + n_experts)
    # TODO(synk): for pathological seq_len (>~400) `period` alone can exceed the
    # VMEM budget; such configs would need the arithmetic fallback path.
    max_m = max(1, _VMEM_STEP_BUDGET // (period * bytes_per_token))
    n_periods = -(-n_tokens // period)               # cdiv
    m = min(max_m, n_periods)
    if n_periods >= 2:                               # keep >=2 steps for v7x megacore
        m = min(m, -(-n_periods // 2))
    tokens_per_step = m * period
    n_steps = -(-n_tokens // tokens_per_step)
    n_pad = n_steps * tokens_per_step                # padding decoupled from step size

    rows_w = (tokens_per_step * topk) // _LANES
    rows_p = (tokens_per_step * n_experts) // _LANES
    total_rows_w = (n_pad * topk) // _LANES
    total_rows_p = (n_pad * n_experts) // _LANES

    w_tile, i_tile, p_tile = _pattern_tiles(
        seq_len, n_enemies, n_allies, topk, n_experts, tokens_per_step)

    w_slab, i_slab, p_slab = pl.pallas_call(
        _copy_kernel,
        grid_spec=pltpu.PrefetchScalarGridSpec(
            num_scalar_prefetch=0,
            grid=(n_steps,),
            # Constant index_map -> tile stays resident in VMEM (fetched once).
            in_specs=[
                pl.BlockSpec((rows_w, _LANES), lambda i: (0, 0)),
                pl.BlockSpec((rows_w, _LANES), lambda i: (0, 0)),
                pl.BlockSpec((rows_p, _LANES), lambda i: (0, 0)),
            ],
            out_specs=(
                pl.BlockSpec((rows_w, _LANES), lambda i: (i, 0)),
                pl.BlockSpec((rows_w, _LANES), lambda i: (i, 0)),
                pl.BlockSpec((rows_p, _LANES), lambda i: (i, 0)),
            ),
        ),
        out_shape=(
            jax.ShapeDtypeStruct((total_rows_w, _LANES), jnp.float32),
            jax.ShapeDtypeStruct((total_rows_w, _LANES), jnp.int32),
            jax.ShapeDtypeStruct((total_rows_p, _LANES), jnp.float32),
        ),
        compiler_params=pltpu.CompilerParams(
            dimension_semantics=("parallel",),
            vmem_limit_bytes=_VMEM_LIMIT_BYTES),
        cost_estimate=pl.CostEstimate(
            flops=0,
            transcendentals=0,
            bytes_accessed=(tokens_per_step + n_pad) * bytes_per_token),
    )(w_tile, i_tile, p_tile)

    # Row-major contiguous reshapes: free (no data movement).
    weights = w_slab.reshape(n_pad, topk)
    indices = i_slab.reshape(n_pad, topk)           # int32 (torch: int64)
    probs = p_slab.reshape(n_pad, n_experts)
    if n_pad != n_tokens:
        # TODO(synk): consumers that tolerate padded rows can take the slabs
        # directly and skip this (copying) slice.
        weights = weights[:n_tokens]
        indices = indices[:n_tokens]
        probs = probs[:n_tokens]

    stats = {"probs": probs, "indices": indices}
    return weights, indices, stats


def _reference(n_tokens, seq_len, n_enemies, n_allies, topk, n_experts):
    """Pure-numpy reference reproducing the PyTorch module semantics."""
    bsa = n_tokens // seq_len
    w = np.zeros((bsa, seq_len, topk), np.float32)
    idx = np.zeros((bsa, seq_len, topk), np.int32)
    p = np.zeros((bsa, seq_len, n_experts), np.float32)
    w[:, 0, 0] = 1.0; idx[:, 0, 0] = 0; p[:, 0, 0] = 1.0
    w[:, 1:1 + n_enemies, 0] = 1.0; idx[:, 1:1 + n_enemies, 0] = 1
    p[:, 1:1 + n_enemies, 1] = 1.0
    w[:, 1 + n_enemies:1 + n_enemies + n_allies, 0] = 1.0
    idx[:, 1 + n_enemies:1 + n_enemies + n_allies, 0] = 2
    p[:, 1 + n_enemies:1 + n_enemies + n_allies, 2] = 1.0
    w[:, -1, 0] = 1.0; idx[:, -1, 0] = 0; p[:, -1, 0] = 1.0
    return (w.reshape(n_tokens, topk),
            idx.reshape(n_tokens, topk),
            p.reshape(n_tokens, n_experts))


if __name__ == "__main__":
    # Small, deterministic config (mirrors `args`):
    batch_size = 2
    n_agents = 3
    n_enemies = 4
    dim = 32                      # transformer_embed_dim
    topk = 2                      # n_activated_experts
    n_routed_experts = 3
    seq_len = 1 + n_enemies + (n_agents - 1) + 1   # = 8
    n_tokens = batch_size * n_agents * seq_len     # = 48

    key = jax.random.PRNGKey(0)
    x = jax.random.normal(key, (n_tokens, dim), dtype=jnp.float32)

    weights, indices, stats = gate_v3_forward(
        x,
        n_agents=n_agents,
        n_enemies=n_enemies,
        topk=topk,
        n_routed_experts=n_routed_experts,
    )
    jax.block_until_ready((weights, indices, stats["probs"]))

    # Check against a pure-numpy reference of the PyTorch forward.
    w_ref, i_ref, p_ref = _reference(
        n_tokens, seq_len, n_enemies, n_agents - 1, topk, n_routed_experts
    )
    np.testing.assert_allclose(np.asarray(weights), w_ref)
    np.testing.assert_array_equal(np.asarray(indices), i_ref)
    np.testing.assert_allclose(np.asarray(stats["probs"]), p_ref)

    print("KERNEL_OK")
</pallas_src>

<mosaic_0001>
module attributes {stable_mosaic.version = 11 : i64} {
  func.func @_copy_kernel(%arg0: i32, %arg1: memref<16x128xf32, #tpu.memory_space<vmem>>, %arg2: memref<16x128xi32, #tpu.memory_space<vmem>>, %arg3: memref<24x128xf32, #tpu.memory_space<vmem>>, %arg4: memref<16x128xf32, #tpu.memory_space<vmem>>, %arg5: memref<16x128xi32, #tpu.memory_space<vmem>>, %arg6: memref<24x128xf32, #tpu.memory_space<vmem>>) attributes {dimension_semantics = [#tpu.dimension_semantics<parallel>], iteration_bounds = array<i64: 1>, scalar_prefetch = 0 : i64, scratch_operands = 0 : i64, tpu.core_type = #tpu.core_type<tc>, window_params = [{pipeline_mode = #tpu.pipeline_mode<synchronous>, transform_indices = @transform_0, window_bounds = array<i64: 16, 128>}, {pipeline_mode = #tpu.pipeline_mode<synchronous>, transform_indices = @transform_1, window_bounds = array<i64: 16, 128>}, {pipeline_mode = #tpu.pipeline_mode<synchronous>, transform_indices = @transform_2, window_bounds = array<i64: 24, 128>}, {transform_indices = @transform_3, window_bounds = array<i64: 16, 128>}, {transform_indices = @transform_4, window_bounds = array<i64: 16, 128>}, {transform_indices = @transform_5, window_bounds = array<i64: 24, 128>}]} {
    %c0 = arith.constant 0 : index
    %c0_0 = arith.constant 0 : index
    %0 = vector.load %arg1[%c0, %c0_0] : memref<16x128xf32, #tpu.memory_space<vmem>>, vector<16x128xf32>
    %c0_1 = arith.constant 0 : index
    %c0_2 = arith.constant 0 : index
    %1 = vector.load %arg4[%c0_1, %c0_2] : memref<16x128xf32, #tpu.memory_space<vmem>>, vector<16x128xf32>
    tpu.vector_store %arg4[%c0_1, %c0_2], %0 {strides = array<i32>} : memref<16x128xf32, #tpu.memory_space<vmem>>, vector<16x128xf32>,
    %c0_3 = arith.constant 0 : index
    %c0_4 = arith.constant 0 : index
    %2 = vector.load %arg2[%c0_3, %c0_4] : memref<16x128xi32, #tpu.memory_space<vmem>>, vector<16x128xi32>
    %c0_5 = arith.constant 0 : index
    %c0_6 = arith.constant 0 : index
    %3 = vector.load %arg5[%c0_5, %c0_6] : memref<16x128xi32, #tpu.memory_space<vmem>>, vector<16x128xi32>
    tpu.vector_store %arg5[%c0_5, %c0_6], %2 {strides = array<i32>} : memref<16x128xi32, #tpu.memory_space<vmem>>, vector<16x128xi32>,
    %c0_7 = arith.constant 0 : index
    %c0_8 = arith.constant 0 : index
    %4 = vector.load %arg3[%c0_7, %c0_8] : memref<24x128xf32, #tpu.memory_space<vmem>>, vector<24x128xf32>
    %c0_9 = arith.constant 0 : index
    %c0_10 = arith.constant 0 : index
    %5 = vector.load %arg6[%c0_9, %c0_10] : memref<24x128xf32, #tpu.memory_space<vmem>>, vector<24x128xf32>
    tpu.vector_store %arg6[%c0_9, %c0_10], %4 {strides = array<i32>} : memref<24x128xf32, #tpu.memory_space<vmem>>, vector<24x128xf32>,
    return
  }
  func.func @transform_0(%arg0: i32) -> (i32, i32) {
    %c0_i32 = arith.constant 0 : i32
    %c0_i32_0 = arith.constant 0 : i32
    %c0_i32_1 = arith.constant 0 : i32
    return %c0_i32, %c0_i32_0 : i32, i32
  }
  func.func @transform_1(%arg0: i32) -> (i32, i32) {
    %c0_i32 = arith.constant 0 : i32
    %c0_i32_0 = arith.constant 0 : i32
    %c0_i32_1 = arith.constant 0 : i32
    return %c0_i32, %c0_i32_0 : i32, i32
  }
  func.func @transform_2(%arg0: i32) -> (i32, i32) {
    %c0_i32 = arith.constant 0 : i32
    %c0_i32_0 = arith.constant 0 : i32
    %c0_i32_1 = arith.constant 0 : i32
    return %c0_i32, %c0_i32_0 : i32, i32
  }
  func.func @transform_3(%arg0: i32) -> (i32, i32) {
    %c0_i32 = arith.constant 0 : i32
    %c0_i32_0 = arith.constant 0 : i32
    return %arg0, %c0_i32 : i32, i32
  }
  func.func @transform_4(%arg0: i32) -> (i32, i32) {
    %c0_i32 = arith.constant 0 : i32
    %c0_i32_0 = arith.constant 0 : i32
    return %arg0, %c0_i32 : i32, i32
  }
  func.func @transform_5(%arg0: i32) -> (i32, i32) {
    %c0_i32 = arith.constant 0 : i32
    %c0_i32_0 = arith.constant 0 : i32
    return %arg0, %c0_i32 : i32, i32
  }
}

</mosaic_0001>

<llo_original>
// kernel: tpu_custom_call.1
$region0: #{tpu_custom_call.1}
  #allocation0 [shape = 'u32[]', space=smem, size = 0x4, offset = 0x4, fixed_abs, tag = 'smem constant byte address 0x4 - core index']
  #allocation1 [shape = 'u32[144,128]{1,0:T(1,128)}', space=vmem, size = 0x12000, scoped, tag = 'internal scratch']
  %s0 = inlined_call_operand.hbm [shape: f32[16,128], index: 0, kind: input, shape index: {}]
  %s1 = inlined_call_operand.hbm [shape: s32[16,128], index: 1, kind: input, shape index: {}]
  %s2 = inlined_call_operand.hbm [shape: f32[24,128], index: 2, kind: input, shape index: {}]
  %s3 = inlined_call_operand.hbm [shape: f32[16,128], index: 3, kind: output, shape index: {0}]
  %s4 = inlined_call_operand.hbm [shape: s32[16,128], index: 4, kind: output, shape index: {1}]
  %s5 = inlined_call_operand.hbm [shape: f32[24,128], index: 5, kind: output, shape index: {2}]
  %6 = xla_tuple %s3, %s4, %s5
  %s7 = sld [smem:[#allocation0]]
  $region50: #{tpu_custom_call.1} parent=0
    _
  %s9 = ssub.s32 1, %s7
  %s10 = scalar_select 0, %s9, %s7
  $region1: #{tpu_custom_call.1} parent=0
    #allocation2 [shape = 'u8[8192]{0}', space=vmem, size = 0x2000, scoped, tag = 'input window, operand 0, single buffered']
    #allocation3 [shape = 's32[1]{0}', space=sflag, size = 0x4, scoped, tag = 'scoped memory for tpu_custom_call.1']
    #allocation4 [shape = 's32[1]{0}', space=sflag, size = 0x4, scoped, tag = 'scoped memory for tpu_custom_call.1']
    #allocation5 [shape = 'u8[8192]{0}', space=vmem, size = 0x2000, scoped, tag = 'input window, operand 1, single buffered']
    #allocation6 [shape = 's32[1]{0}', space=sflag, size = 0x4, scoped, tag = 'scoped memory for tpu_custom_call.1']
    #allocation7 [shape = 'u8[12288]{0}', space=vmem, size = 0x3000, scoped, tag = 'input window, operand 2, single buffered']
    #allocation8 [shape = 'u8[8192]{0}', space=vmem, size = 0x2000, scoped, tag = 'output window, operand 0, single buffered']
    #allocation9 [shape = 'u8[8192]{0}', space=vmem, size = 0x2000, scoped, tag = 'output window, operand 1, single buffered']
    #allocation10 [shape = 's32[1]{0}', space=sflag, size = 0x4, scoped, tag = 'scoped memory for tpu_custom_call.1']
    #allocation11 [shape = 'u8[12288]{0}', space=vmem, size = 0x3000, scoped, tag = 'output window, operand 2, single buffered']
    %11 = vsyncpa [#allocation3], 0
    %12 = vsyncpa [#allocation6], 0
    %13 = vsyncpa [#allocation4], 0
    %14 = vsyncpa [#allocation10], 0
    // Predicated region
    $region2: #{tpu_custom_call.1} parent=1 // pred_check
      _
    $region3: #{tpu_custom_call.1} parent=1 // pred_check_branch
      %16 = sbr.rel (0) target = $region5
    $region4: #{tpu_custom_call.1} parent=1 // pred_region
      %s18 = ssub.s32 256, 256
      %19 = vsyncadd [#allocation3], %s18
      %s20 = sshll.u32 [#allocation2], 4
      %s21 = int_to_ptr.vmem [resolvable:$true] %s20
      %26 = dma.hbm_to_vmem [thread:$0]  %s0, 256, %s21, [#allocation3], 128, 128, 8
    $region5: #{tpu_custom_call.1} parent=1 // pred_fallthru
      _
    // Predicated region
    $region6: #{tpu_custom_call.1} parent=1 // pred_check
      _
    $region7: #{tpu_custom_call.1} parent=1 // pred_check_branch
      %28 = sbr.rel (0) target = $region9
    $region8: #{tpu_custom_call.1} parent=1 // pred_region
      %s30 = ssub.s32 256, 256
      %31 = vsyncadd [#allocation6], %s30
      %s32 = sshll.u32 [#allocation5], 4
      %s33 = int_to_ptr.vmem [resolvable:$true] %s32
      %38 = dma.hbm_to_vmem [thread:$0]  %s1, 256, %s33, [#allocation6], 128, 128, 8
    $region9: #{tpu_custom_call.1} parent=1 // pred_fallthru
      _
    // Predicated region
    $region10: #{tpu_custom_call.1} parent=1 // pred_check
      _
    $region11: #{tpu_custom_call.1} parent=1 // pred_check_branch
      %40 = sbr.rel (0) target = $region13
    $region12: #{tpu_custom_call.1} parent=1 // pred_region
      %s42 = ssub.s32 384, 384
      %43 = vsyncadd [#allocation6], %s42
      %s44 = sshll.u32 [#allocation7], 4
      %s45 = int_to_ptr.vmem [resolvable:$true] %s44
      %50 = dma.hbm_to_vmem [thread:$0]  %s2, 384, %s45, [#allocation6], 128, 128, 8
    $region13: #{tpu_custom_call.1} parent=1 // pred_fallthru
      _
    // Predicated region
    $region14: #{tpu_custom_call.1} parent=1 // pred_check
      _
    $region15: #{tpu_custom_call.1} parent=1 // pred_check_branch
      %52 = sbr.rel (0) target = $region17
    $region16: #{tpu_custom_call.1} parent=1 // pred_region
      %53 = dma.done [#allocation3], 256
    $region17: #{tpu_custom_call.1} parent=1 // pred_fallthru
      _
    // Predicated region
    $region18: #{tpu_custom_call.1} parent=1 // pred_check
      _
    $region19: #{tpu_custom_call.1} parent=1 // pred_check_branch
      %55 = sbr.rel (0) target = $region21
    $region20: #{tpu_custom_call.1} parent=1 // pred_region
      %56 = dma.done [#allocation6], 256
    $region21: #{tpu_custom_call.1} parent=1 // pred_fallthru
      _
    // Predicated region
    $region22: #{tpu_custom_call.1} parent=1 // pred_check
      _
    $region23: #{tpu_custom_call.1} parent=1 // pred_check_branch
      %58 = sbr.rel (0) target = $region25
    $region24: #{tpu_custom_call.1} parent=1 // pred_region
      %59 = dma.done [#allocation6], 384
    $region25: #{tpu_custom_call.1} parent=1 // pred_fallthru
      _
    %v60 = vld [vmem:[#allocation2] sm:$0xff]
    %v61 = vld [vmem:[#allocation2 + $0x8] sm:$0xff]
    %62 = vst [vmem:[#allocation8] sm:$0xff] %v60
    %63 = vst [vmem:[#allocation8 + $0x8] sm:$0xff] %v61
    %v64 = vld [vmem:[#allocation5] sm:$0xff]
    %v65 = vld [vmem:[#allocation5 + $0x8] sm:$0xff]
    %66 = vst [vmem:[#allocation9] sm:$0xff] %v64
    %67 = vst [vmem:[#allocation9 + $0x8] sm:$0xff] %v65
    %v68 = vld [vmem:[#allocation7] sm:$0xff]
    %v69 = vld [vmem:[#allocation7 + $0x8] sm:$0xff]
    %v70 = vld [vmem:[#allocation7 + $0x10] sm:$0xff]
    %71 = vst [vmem:[#allocation11] sm:$0xff] %v68
    %72 = vst [vmem:[#allocation11 + $0x8] sm:$0xff] %v69
    %73 = vst [vmem:[#allocation11 + $0x10] sm:$0xff] %v70
    // Predicated region
    $region26: #{tpu_custom_call.1} parent=1 // pred_check
      _
    $region27: #{tpu_custom_call.1} parent=1 // pred_check_branch
      %75 = sbr.rel (0) target = $region29
    $region28: #{tpu_custom_call.1} parent=1 // pred_region
      %s77 = ssub.s32 256, 256
      %78 = vsyncadd [#allocation4], %s77
      %s79 = sshll.u32 [#allocation8], 4
      %s80 = int_to_ptr.vmem [resolvable:$true] %s79
      %85 = dma.vmem_to_hbm [thread:$0]  %s80, 256, %s3, [#allocation4], 128, 128, 8
    $region29: #{tpu_custom_call.1} parent=1 // pred_fallthru
      _
    // Predicated region
    $region30: #{tpu_custom_call.1} parent=1 // pred_check
      _
    $region31: #{tpu_custom_call.1} parent=1 // pred_check_branch
      %87 = sbr.rel (0) target = $region33
    $region32: #{tpu_custom_call.1} parent=1 // pred_region
      %s89 = ssub.s32 256, 256
      %90 = vsyncadd [#allocation10], %s89
      %s91 = sshll.u32 [#allocation9], 4
      %s92 = int_to_ptr.vmem [resolvable:$true] %s91
      %97 = dma.vmem_to_hbm [thread:$0]  %s92, 256, %s4, [#allocation10], 128, 128, 8
    $region33: #{tpu_custom_call.1} parent=1 // pred_fallthru
      _
    // Predicated region
    $region34: #{tpu_custom_call.1} parent=1 // pred_check
      _
    $region35: #{tpu_custom_call.1} parent=1 // pred_check_branch
      %99 = sbr.rel (0) target = $region37
    $region36: #{tpu_custom_call.1} parent=1 // pred_region
      %s101 = ssub.s32 384, 384
      %102 = vsyncadd [#allocation10], %s101
      %s103 = sshll.u32 [#allocation11], 4
      %s104 = int_to_ptr.vmem [resolvable:$true] %s103
      %109 = dma.vmem_to_hbm [thread:$0]  %s104, 384, %s5, [#allocation10], 128, 128, 8
    $region37: #{tpu_custom_call.1} parent=1 // pred_fallthru
      _
    // Predicated region
    $region38: #{tpu_custom_call.1} parent=1 // pred_check
      _
    $region39: #{tpu_custom_call.1} parent=1 // pred_check_branch
      %111 = sbr.rel (0) target = $region41
    $region40: #{tpu_custom_call.1} parent=1 // pred_region
      %112 = dma.done [#allocation4], 256
    $region41: #{tpu_custom_call.1} parent=1 // pred_fallthru
      _
    // Predicated region
    $region42: #{tpu_custom_call.1} parent=1 // pred_check
      _
    $region43: #{tpu_custom_call.1} parent=1 // pred_check_branch
      %114 = sbr.rel (0) target = $region45
    $region44: #{tpu_custom_call.1} parent=1 // pred_region
      %115 = dma.done [#allocation10], 256
    $region45: #{tpu_custom_call.1} parent=1 // pred_fallthru
      _
    // Predicated region
    $region46: #{tpu_custom_call.1} parent=1 // pred_check
      _
    $region47: #{tpu_custom_call.1} parent=1 // pred_check_branch
      %117 = sbr.rel (0) target = $region49
    $region48: #{tpu_custom_call.1} parent=1 // pred_region
      %118 = dma.done [#allocation10], 384
    $region49: #{tpu_custom_call.1} parent=1 // pred_fallthru
      _
    %119 = vsyncpa [#allocation3], 1
    %120 = vsyncpa [#allocation6], 1
    %121 = vsyncpa [#allocation4], 1
    %122 = vsyncpa [#allocation10], 1

</llo_original>
